<compile_context>
chip_gen: v7x
topology: tpu7x:2x2x1
jax: 0.10.0
libtpu: 0.0.40
codegen_flags: <defaults>
</compile_context>

<pallas_src>
import functools

import jax
import jax.numpy as jnp
from jax import lax
from jax.experimental import pallas as pl
from jax.experimental.pallas import tpu as pltpu


def _postselect_kernel(mask_ref, x_ref, o_ref):
    """(TB, D) float32 tile: projector mask + per-row renormalization.

    mask_ref is a precomputed (1, D) keep-mask (constant block index, so it is
    DMA'd once and stays VMEM-resident); it broadcasts over the TB rows.  The
    binding resource is the HBM DMA stream; all VALU/EUP work here has slack.
    """
    x = x_ref[...]                                             # (TB, D)
    masked = x * mask_ref[...]                                 # apply |on><on|
    sumsq = jnp.sum(masked * masked, axis=1, keepdims=True)    # (TB, 1)
    # NOTE: a zero-probability postselection (sumsq == 0) yields 0 * inf = NaN,
    # matching the PyTorch module / pure-JAX reference's 0/0 semantics.
    o_ref[...] = masked * lax.rsqrt(sumsq)


def _chip_params():
    """(target_tile_bytes, vmem_limit_bytes, num_tensorcores), chip-aware.

    v7x: fastest HBM per TC -> largest tiles to amortize the ~0.35 us per-step
    overhead, but only 64 MiB physical VMEM, and 2 TCs.  v6e: ~4 MiB tiles hit
    ~94% of roofline.  v5e: slower HBM already amortizes the step overhead;
    modest tiles, and its scoped-VMEM default is only 16 MiB so the limit is
    set explicitly.
    """
    kind = ""
    try:
        kind = jax.devices()[0].device_kind.lower()
    except Exception:
        pass
    if "v5" in kind:
        return 2 << 20, 32 << 20, 1
    if "v6" in kind:
        return 4 << 20, 64 << 20, 1
    if "7" in kind:
        return 6 << 20, 44 << 20, 2
    return 4 << 20, 32 << 20, 1          # unknown chip: conservative


def _choose_block_rows(B, D, target_tile_bytes, num_cores, vmem_limit_bytes,
                       itemsize=4):
    """Rows per tile: ~target_tile_bytes tiles, multiple of 8, VMEM-safe."""
    tb = max(8, (target_tile_bytes // (itemsize * D)) // 8 * 8)
    b_up = pl.cdiv(B, 8) * 8            # smallest legal tile cover of the batch
    tb = min(tb, b_up)
    # Multi-TC chips (v7x): prefer >=2 grid steps so megacore can shard the
    # "parallel" batch axis; on 1-TC chips splitting is pure per-step overhead.
    if num_cores > 1 and b_up >= 16 and tb > (b_up + 1) // 2:
        tb = max(8, pl.cdiv(b_up // 2, 8) * 8)
    # Keep double-buffered in + out tiles (plus the tiny mask) inside VMEM.
    budget = vmem_limit_bytes - (2 << 20)
    while tb > 8 and 4 * tb * D * itemsize > budget:
        tb = max(8, (tb // 2) // 8 * 8)
    assert 4 * tb * D * itemsize <= budget, "minimum (8, D) tile exceeds VMEM"
    # TODO(synk): add a D-blocked two-pass path (grid=(B_t, D_t), sumsq
    # accumulated in VMEM scratch over an 'arbitrary' D axis) for very large
    # n_qubits where even an (8, D) tile blows the budget.
    return tb


def postselect(x: jax.Array, *, target_lane: int, on: int, n_qubits: int,
               block_rows: int | None = None) -> jax.Array:
    """x: (B, 2**n_qubits) float32 flattened batch of kets."""
    B, D = x.shape
    assert D == 2 ** n_qubits
    assert D % 128 == 0, "D < 128 underfills the 128-lane vreg"
    # TODO(synk): for n_qubits < 7 (D < 128) repack 128/D kets per lane row so
    # the output stays lane-dense (the keep-mask repeats with period D).
    shift = n_qubits - 1 - target_lane   # lane l -> bit (n-1-l) of flat index

    target_tile_bytes, vmem_limit, num_cores = _chip_params()
    tb = block_rows if block_rows is not None else _choose_block_rows(
        B, D, target_tile_bytes, num_cores, vmem_limit, x.dtype.itemsize)

    # Projector column mask, built once outside the grid and kept VMEM-resident
    # across grid steps via a constant block index.
    bit = (jnp.arange(D, dtype=jnp.int32) >> shift) & 1
    mask = (bit == on).astype(x.dtype).reshape(1, D)
    # TODO(synk): for 2**shift >= 128 the surviving amplitudes form 128-aligned
    # contiguous stripes; a strided input index_map reading only that half
    # would cut HBM read traffic ~2x on this bandwidth-bound kernel.

    # No pad/slice round-trip: Pallas handles the partial edge block (rows are
    # independent, so garbage OOB reads never contaminate real rows, and OOB
    # writes are dropped).
    grid = (pl.cdiv(B, tb),)
    bytes_accessed = 2 * B * D * x.dtype.itemsize + D * x.dtype.itemsize

    return pl.pallas_call(
        _postselect_kernel,
        out_shape=jax.ShapeDtypeStruct((B, D), x.dtype),
        grid_spec=pltpu.PrefetchScalarGridSpec(
            num_scalar_prefetch=0,
            grid=grid,
            in_specs=[pl.BlockSpec((1, D), lambda b: (0, 0)),     # keep-mask
                      pl.BlockSpec((tb, D), lambda b: (b, 0))],   # x tile
            out_specs=pl.BlockSpec((tb, D), lambda b: (b, 0)),
        ),
        compiler_params=pltpu.CompilerParams(
            dimension_semantics=("parallel",),
            vmem_limit_bytes=vmem_limit),
        cost_estimate=pl.CostEstimate(
            flops=3 * B * D, transcendentals=B, bytes_accessed=bytes_accessed),
    )(mask, x)


def postselect_reference(x, *, target_lane, on, n_qubits):
    """Pure-JAX reference mirroring the PyTorch module."""
    B = x.shape[0]
    ket = x.reshape((B,) + (2,) * n_qubits)
    keep = jnp.arange(2) == on
    bshape = [1] * (n_qubits + 1)
    bshape[1 + target_lane] = 2
    ket = ket * keep.reshape(bshape).astype(ket.dtype)
    flat = ket.reshape(B, -1)
    norm = jnp.sqrt(jnp.sum(flat * flat, axis=-1, keepdims=True))
    return flat / norm


if __name__ == "__main__":
    n_qubits = 7            # D = 128 -> lane-dim friendly
    D = 2 ** n_qubits
    target_lane = 2
    on = 1

    key = jax.random.PRNGKey(0)
    # Small batch (single partial tile) and a batch that exercises multiple
    # grid steps / an uneven edge block.
    for B in (2, 20):
        kx, key = jax.random.split(key)
        x = jax.random.normal(kx, (B, D), dtype=jnp.float32)
        # Normalize inputs so they look like valid kets (not required by op).
        x = x / jnp.linalg.norm(x, axis=-1, keepdims=True)

        out = jax.block_until_ready(
            postselect(x, target_lane=target_lane, on=on, n_qubits=n_qubits))
        ref = postselect_reference(x, target_lane=target_lane, on=on,
                                   n_qubits=n_qubits)
        assert out.shape == (B, D), f"bad shape (B={B})"
        assert jnp.allclose(out, ref, atol=1e-5, rtol=1e-5), f"mismatch (B={B})"

    print("KERNEL_OK")
</pallas_src>

<mosaic_0001>
module attributes {stable_mosaic.version = 11 : i64} {
  func.func @_postselect_kernel(%arg0: i32, %arg1: memref<1x128xf32, #tpu.memory_space<vmem>>, %arg2: memref<8x128xf32, #tpu.memory_space<vmem>>, %arg3: memref<8x128xf32, #tpu.memory_space<vmem>>) attributes {dimension_semantics = [#tpu.dimension_semantics<parallel>], iteration_bounds = array<i64: 1>, scalar_prefetch = 0 : i64, scratch_operands = 0 : i64, tpu.core_type = #tpu.core_type<tc>, window_params = [{pipeline_mode = #tpu.pipeline_mode<synchronous>, transform_indices = @transform_0, window_bounds = array<i64: 1, 128>}, {transform_indices = @transform_1, window_bounds = array<i64: 8, 128>}, {transform_indices = @transform_2, window_bounds = array<i64: 8, 128>}]} {
    %c0 = arith.constant 0 : index
    %c0_0 = arith.constant 0 : index
    %0 = vector.load %arg2[%c0, %c0_0] : memref<8x128xf32, #tpu.memory_space<vmem>>, vector<8x128xf32>
    %c0_1 = arith.constant 0 : index
    %c0_2 = arith.constant 0 : index
    %1 = vector.load %arg1[%c0_1, %c0_2] : memref<1x128xf32, #tpu.memory_space<vmem>>, vector<1x128xf32>
    %2 = vector.broadcast %1 : vector<1x128xf32> to vector<8x128xf32>
    %3 = arith.mulf %0, %2 : vector<8x128xf32>
    %4 = arith.mulf %3, %3 : vector<8x128xf32>
    %cst = arith.constant dense<0.000000e+00> : vector<8xf32>
    %5 = vector.multi_reduction <add>, %4, %cst [1] : vector<8x128xf32> to vector<8xf32>
    %6 = vector.shape_cast %5 : vector<8xf32> to vector<8x1xf32>
    %7 = math.rsqrt %6 : vector<8x1xf32>
    %8 = vector.broadcast %7 : vector<8x1xf32> to vector<8x128xf32>
    %9 = arith.mulf %3, %8 : vector<8x128xf32>
    %c0_3 = arith.constant 0 : index
    %c0_4 = arith.constant 0 : index
    %10 = vector.load %arg3[%c0_3, %c0_4] : memref<8x128xf32, #tpu.memory_space<vmem>>, vector<8x128xf32>
    tpu.vector_store %arg3[%c0_3, %c0_4], %9 {strides = array<i32>} : memref<8x128xf32, #tpu.memory_space<vmem>>, vector<8x128xf32>,
    return
  }
  func.func @transform_0(%arg0: i32) -> (i32, i32) {
    %c0_i32 = arith.constant 0 : i32
    %c0_i32_0 = arith.constant 0 : i32
    %c0_i32_1 = arith.constant 0 : i32
    return %c0_i32, %c0_i32_0 : i32, i32
  }
  func.func @transform_1(%arg0: i32) -> (i32, i32) {
    %c0_i32 = arith.constant 0 : i32
    %c0_i32_0 = arith.constant 0 : i32
    return %arg0, %c0_i32 : i32, i32
  }
  func.func @transform_2(%arg0: i32) -> (i32, i32) {
    %c0_i32 = arith.constant 0 : i32
    %c0_i32_0 = arith.constant 0 : i32
    return %arg0, %c0_i32 : i32, i32
  }
}

</mosaic_0001>

<llo_original>
// kernel: tpu_custom_call.1
$region0: #{tpu_custom_call.1}
  #allocation0 [shape = 'u32[]', space=smem, size = 0x4, offset = 0x4, fixed_abs, tag = 'smem constant byte address 0x4 - core index']
  #allocation1 [shape = 'u32[144,128]{1,0:T(1,128)}', space=vmem, size = 0x12000, scoped, tag = 'internal scratch']
  %s0 = inlined_call_operand.hbm [shape: f32[1,128], index: 0, kind: input, shape index: {}]
  %s1 = inlined_call_operand.vmem [shape: f32[2,128], index: 1, kind: input, shape index: {}]
  %s2 = inlined_call_operand.hbm [shape: f32[2,128], index: 2, kind: output, shape index: {}]
  %s3 = sld [smem:[#allocation0]]
  $region22: #{tpu_custom_call.1} parent=0
    _
  %s5 = ssub.s32 1, %s3
  %s6 = scalar_select 0, %s5, %s3
  $region1: #{tpu_custom_call.1} parent=0
    #allocation2 [shape = 'u8[512]{0}', space=vmem, size = 0x400, scoped, tag = 'input window, operand 0, single buffered']
    #allocation3 [shape = 's32[1]{0}', space=sflag, size = 0x4, scoped, tag = 'scoped memory for tpu_custom_call.1']
    #allocation4 [shape = 's32[1]{0}', space=sflag, size = 0x4, scoped, tag = 'scoped memory for tpu_custom_call.1']
    #allocation5 [shape = 'u8[4096]{0}', space=vmem, size = 0x1000, scoped, tag = 'output window, operand 0, single buffered']
    %7 = vsyncpa [#allocation3], 0
    %8 = vsyncpa [#allocation4], 0
    // Predicated region
    $region2: #{tpu_custom_call.1} parent=1 // pred_check
      _
    $region3: #{tpu_custom_call.1} parent=1 // pred_check_branch
      %10 = sbr.rel (0) target = $region5
    $region4: #{tpu_custom_call.1} parent=1 // pred_region
      %s12 = ssub.s32 16, 16
      %13 = vsyncadd [#allocation3], %s12
      %s15 = sshll.u32 [#allocation2], 4
      %s16 = int_to_ptr.vmem [resolvable:$true] %s15
      %18 = dma.hbm_to_vmem [thread:$0]  %s0, 16, %s16, [#allocation3]
    $region5: #{tpu_custom_call.1} parent=1 // pred_fallthru
      _
    // Predicated region
    $region6: #{tpu_custom_call.1} parent=1 // pred_check
      _
    $region7: #{tpu_custom_call.1} parent=1 // pred_check_branch
      %20 = sbr.rel (0) target = $region9
    $region8: #{tpu_custom_call.1} parent=1 // pred_region
      _
    $region9: #{tpu_custom_call.1} parent=1 // pred_fallthru
      _
    // Predicated region
    $region10: #{tpu_custom_call.1} parent=1 // pred_check
      _
    $region11: #{tpu_custom_call.1} parent=1 // pred_check_branch
      %22 = sbr.rel (0) target = $region13
    $region12: #{tpu_custom_call.1} parent=1 // pred_region
      %23 = dma.done [#allocation3], 16
    $region13: #{tpu_custom_call.1} parent=1 // pred_fallthru
      _
    %v24 = vld [vmem:[%s1] sm:$0xff]
    %v25 = vld [vmem:[#allocation2] sm:$0x1]
    %v27 = vlaneseq
    %v28 = vshrl.u32 %v27, 7
    %v29 = vsub.s32 0, %v28
    %v30 = vrot.slane %v25, %v29
    %v32 = vmul.f32 %v24, %v30
    %v33 = vmul.f32 %v32, %v32
    %34 = vadd.xlane.f32.xlu0 %v33
    %v35 = vpop.xlane.xlu0 %34
    %v36 = vrsqrt.pop %v35
    %v37 = vmul.f32 %v32, %v36
    %38 = vst [vmem:[#allocation5] sm:$0xff] %v37
    // Predicated region
    $region14: #{tpu_custom_call.1} parent=1 // pred_check
      _
    $region15: #{tpu_custom_call.1} parent=1 // pred_check_branch
      %40 = sbr.rel (0) target = $region17
    $region16: #{tpu_custom_call.1} parent=1 // pred_region
      %s42 = ssub.s32 128, 32
      %43 = vsyncadd [#allocation4], %s42
      %s44 = sshll.u32 [#allocation5], 4
      %s45 = int_to_ptr.vmem [resolvable:$true] %s44
      %50 = dma.vmem_to_hbm [thread:$0]  %s45, 32, %s2, [#allocation4], 32, 32, 2
    $region17: #{tpu_custom_call.1} parent=1 // pred_fallthru
      _
    // Predicated region
    $region18: #{tpu_custom_call.1} parent=1 // pred_check
      _
    $region19: #{tpu_custom_call.1} parent=1 // pred_check_branch
      %52 = sbr.rel (0) target = $region21
    $region20: #{tpu_custom_call.1} parent=1 // pred_region
      %53 = dma.done [#allocation4], 128
    $region21: #{tpu_custom_call.1} parent=1 // pred_fallthru
      _
    %54 = vsyncpa [#allocation3], 1
    %55 = vsyncpa [#allocation4], 1

</llo_original>
